<compile_context>
chip_gen: v5e
topology: v5e:2x2
jax: 0.10.0
libtpu: 0.0.40
codegen_flags: <defaults>
</compile_context>

<pallas_src>
import math

import jax
import jax.numpy as jnp
from jax import lax
from jax.experimental import pallas as pl
from jax.experimental.pallas import tpu as pltpu


_LANES = 128
_MAX_WIDTH = 32768                 # elements per row of the 2-D view
_TARGET_BLOCK_ELEMS = 256 * 1024   # ~1 MiB f32 per block


def _choose_width(total, d):
    """Largest lane-dense width W with W % d == 0 and total % W == 0."""
    base = d * _LANES // math.gcd(d, _LANES)   # lcm(d, 128)
    cap = min(total, _MAX_WIDTH)
    m = cap // base
    while m >= 1:
        w = m * base
        if total % w == 0:
            return w
        m -= 1
    # Fallback: last dim of the 2-D view == D (full-dim block is always legal).
    return d


def _selective_softplus_2d(x2d, s, e, d, tr, w):
    rows = x2d.shape[0]

    def kernel(x_ref, o_ref):
        x = x_ref[...]
        # Rebuild the position along the original last dim (W % d == 0 by
        # construction, so each row starts at phase 0).
        col = lax.broadcasted_iota(jnp.int32, (tr, w), 1)
        col_in_d = col % d
        mask = (col_in_d >= s) & (col_in_d < e)
        xf = x.astype(jnp.float32)
        # Same formula as torch: (x.exp() + 1).log()
        sp = jnp.log(jnp.exp(xf) + 1.0).astype(x.dtype)
        o_ref[...] = jnp.where(mask, sp, x)

    return pl.pallas_call(
        kernel,
        out_shape=jax.ShapeDtypeStruct((rows, w), x2d.dtype),
        grid_spec=pltpu.PrefetchScalarGridSpec(
            num_scalar_prefetch=0,
            grid=(pl.cdiv(rows, tr),),
            in_specs=[pl.BlockSpec((tr, w), lambda i: (i, 0))],
            out_specs=pl.BlockSpec((tr, w), lambda i: (i, 0)),
        ),
        compiler_params=pltpu.CompilerParams(
            dimension_semantics=("parallel",)),
    )(x2d)


def selective_softplus(x, start, end):
    """Functional equivalent of torch's SelectiveSoftplus.forward."""
    d = x.shape[-1]
    total = x.size
    # Normalize the bounds exactly like python/torch slicing x[..., s:e].
    s, e, _ = slice(start, end).indices(d)

    w = _choose_width(total, d)
    rows = total // w
    x2d = jnp.reshape(x, (rows, w))          # free row-major re-view, no copy

    # Row tile: ~1 MiB blocks, multiple of 8 sublanes (or the full row count).
    tr = max(1, _TARGET_BLOCK_ELEMS // w)
    if tr >= rows:
        tr = rows
    else:
        tr = max(8, (tr // 8) * 8)

    out2d = _selective_softplus_2d(x2d, s, e, d, tr, w)
    return jnp.reshape(out2d, x.shape)       # free re-view back


class SelectiveSoftplus:
    """JAX/Pallas mirror of the PyTorch SelectiveSoftplus module."""
    # TODO(synk): PyTorch mutates x in place; JAX is functional, so a new
    # array with identical values is returned instead.

    def __init__(self, start, end):
        self.s = start
        self.e = end

    def __call__(self, x):
        return selective_softplus(x, self.s, self.e)


if __name__ == "__main__":
    key = jax.random.PRNGKey(0)
    # Small NCHW-like feature map; softplus applied to channels 4:12 of the
    # last dimension, the rest passed through untouched.
    x = jax.random.normal(key, (2, 4, 16, 16), dtype=jnp.float32)

    module = SelectiveSoftplus(4, 12)
    y = module(x)
    y = jax.block_until_ready(y)

    # Reference: same math as torch's x[..., s:e] = (x[..., s:e].exp()+1).log()
    ref = x.at[..., 4:12].set(jnp.log(jnp.exp(x[..., 4:12]) + 1.0))

    assert y.shape == x.shape, y.shape
    assert y.dtype == x.dtype
    assert bool(jnp.allclose(y, ref, atol=1e-6, rtol=1e-6))
    # Untouched region must be bit-identical.
    assert bool(jnp.all(y[..., :4] == x[..., :4]))
    assert bool(jnp.all(y[..., 12:] == x[..., 12:]))

    print("KERNEL_OK")
</pallas_src>

<mosaic_0001>
module attributes {stable_mosaic.version = 11 : i64} {
  func.func @kernel(%arg0: i32, %arg1: memref<1x2048xf32, #tpu.memory_space<vmem>>, %arg2: memref<1x2048xf32, #tpu.memory_space<vmem>>) attributes {dimension_semantics = [#tpu.dimension_semantics<parallel>], iteration_bounds = array<i64: 1>, scalar_prefetch = 0 : i64, scratch_operands = 0 : i64, tpu.core_type = #tpu.core_type<tc>, window_params = [{transform_indices = @transform_0, window_bounds = array<i64: 1, 2048>}, {transform_indices = @transform_1, window_bounds = array<i64: 1, 2048>}]} {
    %c0 = arith.constant 0 : index
    %c0_0 = arith.constant 0 : index
    %0 = vector.load %arg1[%c0, %c0_0] : memref<1x2048xf32, #tpu.memory_space<vmem>>, vector<1x2048xf32>
    %1 = tpu.iota {dimensions = array<i32: 1>} : vector<1x2048xi32>
    %c16_i32 = arith.constant 16 : i32
    %c0_i32 = arith.constant 0 : i32
    %2 = arith.cmpi eq, %c16_i32, %c0_i32 : i32
    %c1_i32 = arith.constant 1 : i32
    %3 = arith.select %2, %c1_i32, %c16_i32 : i32
    %4 = vector.broadcast %3 : i32 to vector<1x2048xi32>
    %5 = arith.remsi %1, %4 : vector<1x2048xi32>
    %c0_i32_1 = arith.constant 0 : i32
    %6 = vector.broadcast %c0_i32_1 : i32 to vector<1x2048xi32>
    %7 = arith.cmpi ne, %5, %6 : vector<1x2048xi32>
    %c0_i32_2 = arith.constant 0 : i32
    %8 = vector.broadcast %c0_i32_2 : i32 to vector<1x2048xi32>
    %9 = arith.cmpi slt, %5, %8 : vector<1x2048xi32>
    %c0_i32_3 = arith.constant 0 : i32
    %10 = arith.cmpi slt, %3, %c0_i32_3 : i32
    %11 = vector.broadcast %10 : i1 to vector<1x2048xi1>
    %12 = vector.broadcast %11 : vector<1x2048xi1> to vector<1x2048xi1>
    %13 = arith.xori %9, %12 : vector<1x2048xi1>
    %14 = arith.andi %13, %7 : vector<1x2048xi1>
    %15 = vector.broadcast %3 : i32 to vector<1x2048xi32>
    %16 = arith.addi %5, %15 : vector<1x2048xi32>
    %17 = arith.select %14, %16, %5 : vector<1x2048xi1>, vector<1x2048xi32>
    %c4_i32 = arith.constant 4 : i32
    %18 = vector.broadcast %c4_i32 : i32 to vector<1x2048xi32>
    %19 = arith.cmpi sge, %17, %18 : vector<1x2048xi32>
    %c12_i32 = arith.constant 12 : i32
    %20 = vector.broadcast %c12_i32 : i32 to vector<1x2048xi32>
    %21 = arith.cmpi slt, %17, %20 : vector<1x2048xi32>
    %22 = arith.andi %19, %21 : vector<1x2048xi1>
    %23 = math.exp %0 : vector<1x2048xf32>
    %cst = arith.constant 1.000000e+00 : f32
    %24 = vector.broadcast %cst : f32 to vector<1x2048xf32>
    %25 = arith.addf %23, %24 : vector<1x2048xf32>
    %26 = math.log %25 : vector<1x2048xf32>
    %27 = arith.select %22, %26, %0 : vector<1x2048xi1>, vector<1x2048xf32>
    %c0_4 = arith.constant 0 : index
    %c0_5 = arith.constant 0 : index
    %28 = vector.load %arg2[%c0_4, %c0_5] : memref<1x2048xf32, #tpu.memory_space<vmem>>, vector<1x2048xf32>
    tpu.vector_store %arg2[%c0_4, %c0_5], %27 {strides = array<i32>} : memref<1x2048xf32, #tpu.memory_space<vmem>>, vector<1x2048xf32>,
    return
  }
  func.func @transform_0(%arg0: i32) -> (i32, i32) {
    %c0_i32 = arith.constant 0 : i32
    %c0_i32_0 = arith.constant 0 : i32
    return %arg0, %c0_i32 : i32, i32
  }
  func.func @transform_1(%arg0: i32) -> (i32, i32) {
    %c0_i32 = arith.constant 0 : i32
    %c0_i32_0 = arith.constant 0 : i32
    return %arg0, %c0_i32 : i32, i32
  }
}

</mosaic_0001>

<llo_original>
// kernel: tpu_custom_call.1
$region0: #{tpu_custom_call.1}
  #allocation0 [shape = 'u32[]', space=smem, size = 0x4, offset = 0x4, fixed_abs, tag = 'smem constant byte address 0x4 - core index']
  #allocation1 [shape = 'u32[72,128]{1,0:T(1,128)}', space=vmem, size = 0x9000, scoped, tag = 'internal scratch']
  %s0 = inlined_call_operand.hbm [shape: f32[1,2048], index: 0, kind: input, shape index: {}]
  %s1 = inlined_call_operand.hbm [shape: f32[1,2048], index: 1, kind: output, shape index: {}]
  %s2 = sld [smem:[#allocation0]]
  $region18: #{tpu_custom_call.1} parent=0
    _
  %s4 = ssub.s32 1, %s2
  %s5 = scalar_select 0, %s4, %s2
  $region1: #{tpu_custom_call.1} parent=0
    #allocation2 [shape = 'u8[8192]{0}', space=vmem, size = 0x2000, scoped, tag = 'input window, operand 0, single buffered']
    #allocation3 [shape = 's32[1]{0}', space=sflag, size = 0x4, scoped, tag = 'scoped memory for tpu_custom_call.1']
    #allocation4 [shape = 's32[1]{0}', space=sflag, size = 0x4, scoped, tag = 'scoped memory for tpu_custom_call.1']
    #allocation5 [shape = 'u8[8192]{0}', space=vmem, size = 0x2000, scoped, tag = 'output window, operand 0, single buffered']
    %6 = vsyncpa [#allocation3], 0
    %7 = vsyncpa [#allocation4], 0
    // Predicated region
    $region2: #{tpu_custom_call.1} parent=1 // pred_check
      _
    $region3: #{tpu_custom_call.1} parent=1 // pred_check_branch
      %9 = sbr.rel (0) target = $region5
    $region4: #{tpu_custom_call.1} parent=1 // pred_region
      %11 = vsyncadd [#allocation3], 0
      %s13 = sshll.u32 %s0, 4
      %s14 = int_to_ptr.hbm [resolvable:$true] %s13
      %s15 = sshll.u32 [#allocation2], 4
      %s16 = int_to_ptr.vmem [resolvable:$true] %s15
      %18 = dma.hbm_to_vmem [thread:$0]  %s14, 256, %s16, [#allocation3]
    $region5: #{tpu_custom_call.1} parent=1 // pred_fallthru
      _
    // Predicated region
    $region6: #{tpu_custom_call.1} parent=1 // pred_check
      _
    $region7: #{tpu_custom_call.1} parent=1 // pred_check_branch
      %20 = sbr.rel (0) target = $region9
    $region8: #{tpu_custom_call.1} parent=1 // pred_region
      %22 = dma.done [#allocation3], 256
    $region9: #{tpu_custom_call.1} parent=1 // pred_fallthru
      _
    %v23 = vld [vmem:[#allocation2] sm:$0xff]
    %v24 = vld [vmem:[#allocation2 + $0x8] sm:$0xff]
    %v25 = vlaneseq
    %v26 = vand.u32 %v25, 127
    %v27 = vadd.s32 %v26, 128
    %v28 = vadd.s32 %v26, 256
    %v29 = vadd.s32 %v26, 384
    %v30 = vadd.s32 %v26, 512
    %v31 = vadd.s32 %v26, 640
    %v32 = vadd.s32 %v26, 768
    %v33 = vadd.s32 %v26, 896
    %v34 = vadd.s32 %v26, 1024
    %v35 = vadd.s32 %v26, 1152
    %v36 = vadd.s32 %v26, 1280
    %v37 = vadd.s32 %v26, 1408
    %v38 = vadd.s32 %v26, 1536
    %v39 = vadd.s32 %v26, 1664
    %v40 = vadd.s32 %v26, 1792
    %v41 = vadd.s32 %v26, 1920
    %vm42 = vcmp.lt.s32.totalorder %v26, 0
    %v43 = vsub.s32 0, %v26
    %v44 = vsel %vm42, %v43, %v26
    %v45 = vshrl.u32 %v44, 4
    %v46 = vand.u32 %v44, 15
    %v47 = vsub.s32 0, %v46
    %v48 = vsel %vm42, %v47, %v46
    %vm49 = vcmp.lt.s32.totalorder %v27, 0
    %v50 = vsub.s32 0, %v27
    %v51 = vsel %vm49, %v50, %v27
    %v52 = vshrl.u32 %v51, 4
    %v53 = vand.u32 %v51, 15
    %v54 = vsub.s32 0, %v53
    %v55 = vsel %vm49, %v54, %v53
    %vm56 = vcmp.lt.s32.totalorder %v28, 0
    %v57 = vsub.s32 0, %v28
    %v58 = vsel %vm56, %v57, %v28
    %v59 = vshrl.u32 %v58, 4
    %v60 = vand.u32 %v58, 15
    %v61 = vsub.s32 0, %v60
    %v62 = vsel %vm56, %v61, %v60
    %vm63 = vcmp.lt.s32.totalorder %v29, 0
    %v64 = vsub.s32 0, %v29
    %v65 = vsel %vm63, %v64, %v29
    %v66 = vshrl.u32 %v65, 4
    %v67 = vand.u32 %v65, 15
    %v68 = vsub.s32 0, %v67
    %v69 = vsel %vm63, %v68, %v67
    %vm70 = vcmp.lt.s32.totalorder %v30, 0
    %v71 = vsub.s32 0, %v30
    %v72 = vsel %vm70, %v71, %v30
    %v73 = vshrl.u32 %v72, 4
    %v74 = vand.u32 %v72, 15
    %v75 = vsub.s32 0, %v74
    %v76 = vsel %vm70, %v75, %v74
    %vm77 = vcmp.lt.s32.totalorder %v31, 0
    %v78 = vsub.s32 0, %v31
    %v79 = vsel %vm77, %v78, %v31
    %v80 = vshrl.u32 %v79, 4
    %v81 = vand.u32 %v79, 15
    %v82 = vsub.s32 0, %v81
    %v83 = vsel %vm77, %v82, %v81
    %vm84 = vcmp.lt.s32.totalorder %v32, 0
    %v85 = vsub.s32 0, %v32
    %v86 = vsel %vm84, %v85, %v32
    %v87 = vshrl.u32 %v86, 4
    %v88 = vand.u32 %v86, 15
    %v89 = vsub.s32 0, %v88
    %v90 = vsel %vm84, %v89, %v88
    %vm91 = vcmp.lt.s32.totalorder %v33, 0
    %v92 = vsub.s32 0, %v33
    %v93 = vsel %vm91, %v92, %v33
    %v94 = vshrl.u32 %v93, 4
    %v95 = vand.u32 %v93, 15
    %v96 = vsub.s32 0, %v95
    %v97 = vsel %vm91, %v96, %v95
    %vm98 = vcmp.lt.s32.totalorder %v34, 0
    %v99 = vsub.s32 0, %v34
    %v100 = vsel %vm98, %v99, %v34
    %v101 = vshrl.u32 %v100, 4
    %v102 = vand.u32 %v100, 15
    %v103 = vsub.s32 0, %v102
    %v104 = vsel %vm98, %v103, %v102
    %vm105 = vcmp.lt.s32.totalorder %v35, 0
    %v106 = vsub.s32 0, %v35
    %v107 = vsel %vm105, %v106, %v35
    %v108 = vshrl.u32 %v107, 4
    %v109 = vand.u32 %v107, 15
    %v110 = vsub.s32 0, %v109
    %v111 = vsel %vm105, %v110, %v109
    %vm112 = vcmp.lt.s32.totalorder %v36, 0
    %v113 = vsub.s32 0, %v36
    %v114 = vsel %vm112, %v113, %v36
    %v115 = vshrl.u32 %v114, 4
    %v116 = vand.u32 %v114, 15
    %v117 = vsub.s32 0, %v116
    %v118 = vsel %vm112, %v117, %v116
    %vm119 = vcmp.lt.s32.totalorder %v37, 0
    %v120 = vsub.s32 0, %v37
    %v121 = vsel %vm119, %v120, %v37
    %v122 = vshrl.u32 %v121, 4
    %v123 = vand.u32 %v121, 15
    %v124 = vsub.s32 0, %v123
    %v125 = vsel %vm119, %v124, %v123
    %vm126 = vcmp.lt.s32.totalorder %v38, 0
    %v127 = vsub.s32 0, %v38
    %v128 = vsel %vm126, %v127, %v38
    %v129 = vshrl.u32 %v128, 4
    %v130 = vand.u32 %v128, 15
    %v131 = vsub.s32 0, %v130
    %v132 = vsel %vm126, %v131, %v130
    %vm133 = vcmp.lt.s32.totalorder %v39, 0
    %v134 = vsub.s32 0, %v39
    %v135 = vsel %vm133, %v134, %v39
    %v136 = vshrl.u32 %v135, 4
    %v137 = vand.u32 %v135, 15
    %v138 = vsub.s32 0, %v137
    %v139 = vsel %vm133, %v138, %v137
    %vm140 = vcmp.lt.s32.totalorder %v40, 0
    %v141 = vsub.s32 0, %v40
    %v142 = vsel %vm140, %v141, %v40
    %v143 = vshrl.u32 %v142, 4
    %v144 = vand.u32 %v142, 15
    %v145 = vsub.s32 0, %v144
    %v146 = vsel %vm140, %v145, %v144
    %vm147 = vcmp.lt.s32.totalorder %v41, 0
    %v148 = vsub.s32 0, %v41
    %v149 = vsel %vm147, %v148, %v41
    %v150 = vshrl.u32 %v149, 4
    %v151 = vand.u32 %v149, 15
    %v152 = vsub.s32 0, %v151
    %v153 = vsel %vm147, %v152, %v151
    %vm154 = vcmp.ne.s32.totalorder %v48, 0
    %vm155 = vcmp.ne.s32.totalorder %v55, 0
    %vm156 = vcmp.ne.s32.totalorder %v62, 0
    %vm157 = vcmp.ne.s32.totalorder %v69, 0
    %vm158 = vcmp.ne.s32.totalorder %v76, 0
    %vm159 = vcmp.ne.s32.totalorder %v83, 0
    %vm160 = vcmp.ne.s32.totalorder %v90, 0
    %vm161 = vcmp.ne.s32.totalorder %v97, 0
    %vm162 = vcmp.ne.s32.totalorder %v104, 0
    %vm163 = vcmp.ne.s32.totalorder %v111, 0
    %vm164 = vcmp.ne.s32.totalorder %v118, 0
    %vm165 = vcmp.ne.s32.totalorder %v125, 0
    %vm166 = vcmp.ne.s32.totalorder %v132, 0
    %vm167 = vcmp.ne.s32.totalorder %v139, 0
    %vm168 = vcmp.ne.s32.totalorder %v146, 0
    %vm169 = vcmp.ne.s32.totalorder %v153, 0
    %vm170 = vcmp.lt.s32.totalorder %v48, 0
    %vm171 = vcmp.lt.s32.totalorder %v55, 0
    %vm172 = vcmp.lt.s32.totalorder %v62, 0
    %vm173 = vcmp.lt.s32.totalorder %v69, 0
    %vm174 = vcmp.lt.s32.totalorder %v76, 0
    %vm175 = vcmp.lt.s32.totalorder %v83, 0
    %vm176 = vcmp.lt.s32.totalorder %v90, 0
    %vm177 = vcmp.lt.s32.totalorder %v97, 0
    %vm178 = vcmp.lt.s32.totalorder %v104, 0
    %vm179 = vcmp.lt.s32.totalorder %v111, 0
    %vm180 = vcmp.lt.s32.totalorder %v118, 0
    %vm181 = vcmp.lt.s32.totalorder %v125, 0
    %vm182 = vcmp.lt.s32.totalorder %v132, 0
    %vm183 = vcmp.lt.s32.totalorder %v139, 0
    %vm184 = vcmp.lt.s32.totalorder %v146, 0
    %vm185 = vcmp.lt.s32.totalorder %v153, 0
    %vm186 = vmand %vm170, %vm154
    %vm187 = vmand %vm171, %vm155
    %vm188 = vmand %vm172, %vm156
    %vm189 = vmand %vm173, %vm157
    %vm190 = vmand %vm174, %vm158
    %vm191 = vmand %vm175, %vm159
    %vm192 = vmand %vm176, %vm160
    %vm193 = vmand %vm177, %vm161
    %vm194 = vmand %vm178, %vm162
    %vm195 = vmand %vm179, %vm163
    %vm196 = vmand %vm180, %vm164
    %vm197 = vmand %vm181, %vm165
    %vm198 = vmand %vm182, %vm166
    %vm199 = vmand %vm183, %vm167
    %vm200 = vmand %vm184, %vm168
    %vm201 = vmand %vm185, %vm169
    %v202 = vadd.s32 %v48, 16
    %v203 = vadd.s32 %v55, 16
    %v204 = vadd.s32 %v62, 16
    %v205 = vadd.s32 %v69, 16
    %v206 = vadd.s32 %v76, 16
    %v207 = vadd.s32 %v83, 16
    %v208 = vadd.s32 %v90, 16
    %v209 = vadd.s32 %v97, 16
    %v210 = vadd.s32 %v104, 16
    %v211 = vadd.s32 %v111, 16
    %v212 = vadd.s32 %v118, 16
    %v213 = vadd.s32 %v125, 16
    %v214 = vadd.s32 %v132, 16
    %v215 = vadd.s32 %v139, 16
    %v216 = vadd.s32 %v146, 16
    %v217 = vadd.s32 %v153, 16
    %v218 = vsel %vm186, %v202, %v48
    %v219 = vsel %vm187, %v203, %v55
    %v220 = vsel %vm188, %v204, %v62
    %v221 = vsel %vm189, %v205, %v69
    %v222 = vsel %vm190, %v206, %v76
    %v223 = vsel %vm191, %v207, %v83
    %v224 = vsel %vm192, %v208, %v90
    %v225 = vsel %vm193, %v209, %v97
    %v226 = vsel %vm194, %v210, %v104
    %v227 = vsel %vm195, %v211, %v111
    %v228 = vsel %vm196, %v212, %v118
    %v229 = vsel %vm197, %v213, %v125
    %v230 = vsel %vm198, %v214, %v132
    %v231 = vsel %vm199, %v215, %v139
    %v232 = vsel %vm200, %v216, %v146
    %v233 = vsel %vm201, %v217, %v153
    %vm234 = vcmp.ge.s32.totalorder %v218, 4
    %vm235 = vcmp.ge.s32.totalorder %v219, 4
    %vm236 = vcmp.ge.s32.totalorder %v220, 4
    %vm237 = vcmp.ge.s32.totalorder %v221, 4
    %vm238 = vcmp.ge.s32.totalorder %v222, 4
    %vm239 = vcmp.ge.s32.totalorder %v223, 4
    %vm240 = vcmp.ge.s32.totalorder %v224, 4
    %vm241 = vcmp.ge.s32.totalorder %v225, 4
    %vm242 = vcmp.ge.s32.totalorder %v226, 4
    %vm243 = vcmp.ge.s32.totalorder %v227, 4
    %vm244 = vcmp.ge.s32.totalorder %v228, 4
    %vm245 = vcmp.ge.s32.totalorder %v229, 4
    %vm246 = vcmp.ge.s32.totalorder %v230, 4
    %vm247 = vcmp.ge.s32.totalorder %v231, 4
    %vm248 = vcmp.ge.s32.totalorder %v232, 4
    %vm249 = vcmp.ge.s32.totalorder %v233, 4
    %vm250 = vcmp.lt.s32.totalorder %v218, 12
    %vm251 = vcmp.lt.s32.totalorder %v219, 12
    %vm252 = vcmp.lt.s32.totalorder %v220, 12
    %vm253 = vcmp.lt.s32.totalorder %v221, 12
    %vm254 = vcmp.lt.s32.totalorder %v222, 12
    %vm255 = vcmp.lt.s32.totalorder %v223, 12
    %vm256 = vcmp.lt.s32.totalorder %v224, 12
    %vm257 = vcmp.lt.s32.totalorder %v225, 12
    %vm258 = vcmp.lt.s32.totalorder %v226, 12
    %vm259 = vcmp.lt.s32.totalorder %v227, 12
    %vm260 = vcmp.lt.s32.totalorder %v228, 12
    %vm261 = vcmp.lt.s32.totalorder %v229, 12
    %vm262 = vcmp.lt.s32.totalorder %v230, 12
    %vm263 = vcmp.lt.s32.totalorder %v231, 12
    %vm264 = vcmp.lt.s32.totalorder %v232, 12
    %vm265 = vcmp.lt.s32.totalorder %v233, 12
    %vm266 = vmand %vm234, %vm250
    %vm267 = vmand %vm235, %vm251
    %vm268 = vmand %vm236, %vm252
    %vm269 = vmand %vm237, %vm253
    %vm270 = vmand %vm238, %vm254
    %vm271 = vmand %vm239, %vm255
    %vm272 = vmand %vm240, %vm256
    %vm273 = vmand %vm241, %vm257
    %vm274 = vmand %vm242, %vm258
    %vm275 = vmand %vm243, %vm259
    %vm276 = vmand %vm244, %vm260
    %vm277 = vmand %vm245, %vm261
    %vm278 = vmand %vm246, %vm262
    %vm279 = vmand %vm247, %vm263
    %vm280 = vmand %vm248, %vm264
    %vm281 = vmand %vm249, %vm265
    %v282 = vmul.f32 %v23, 1.442695
    %v283 = vpow.pop %v282
    %v284 = vmul.f32 %v24, 1.442695
    %v285 = vpow.pop %v284
    %v286 = vadd.f32 %v283, 1.0
    %v287 = vadd.f32 %v285, 1.0
    %v288 = vlog2.pop %v286
    %v289 = vmul.f32 %v288, 0.6931472
    %v290 = vlog2.pop %v287
    %v291 = vmul.f32 %v290, 0.6931472
    %v294 = vperm.slane %v289, 0
    %v295 = vperm.slane %v289, 1
    %v296 = vperm.slane %v289, 2
    %v297 = vperm.slane %v289, 3
    %v298 = vperm.slane %v289, 4
    %v299 = vperm.slane %v289, 5
    %v300 = vperm.slane %v289, 6
    %v301 = vperm.slane %v289, 7
    %v302 = vperm.slane %v291, 0
    %v303 = vperm.slane %v291, 1
    %v304 = vperm.slane %v291, 2
    %v305 = vperm.slane %v291, 3
    %v306 = vperm.slane %v291, 4
    %v307 = vperm.slane %v291, 5
    %v308 = vperm.slane %v291, 6
    %v309 = vperm.slane %v291, 7
    %v328 = vperm.slane %v23, 0
    %v329 = vperm.slane %v23, 1
    %v330 = vperm.slane %v23, 2
    %v331 = vperm.slane %v23, 3
    %v332 = vperm.slane %v23, 4
    %v333 = vperm.slane %v23, 5
    %v334 = vperm.slane %v23, 6
    %v335 = vperm.slane %v23, 7
    %v336 = vperm.slane %v24, 0
    %v337 = vperm.slane %v24, 1
    %v338 = vperm.slane %v24, 2
    %v339 = vperm.slane %v24, 3
    %v340 = vperm.slane %v24, 4
    %v341 = vperm.slane %v24, 5
    %v342 = vperm.slane %v24, 6
    %v343 = vperm.slane %v24, 7
    %v360 = vsel %vm266, %v294, %v328
    %v361 = vsel %vm267, %v295, %v329
    %v362 = vsel %vm268, %v296, %v330
    %v363 = vsel %vm269, %v297, %v331
    %v364 = vsel %vm270, %v298, %v332
    %v365 = vsel %vm271, %v299, %v333
    %v366 = vsel %vm272, %v300, %v334
    %v367 = vsel %vm273, %v301, %v335
    %v368 = vsel %vm274, %v302, %v336
    %v369 = vsel %vm275, %v303, %v337
    %v370 = vsel %vm276, %v304, %v338
    %v371 = vsel %vm277, %v305, %v339
    %v372 = vsel %vm278, %v306, %v340
    %v373 = vsel %vm279, %v307, %v341
    %v374 = vsel %vm280, %v308, %v342
    %v375 = vsel %vm281, %v309, %v343
    %v392 = vrot.slane %v361, 7
    %v393 = vrot.slane %v362, 6
    %v394 = vrot.slane %v363, 5
    %v395 = vrot.slane %v364, 4
    %v396 = vrot.slane %v365, 3
    %v397 = vrot.slane %v366, 2
    %v398 = vrot.slane %v367, 1
    %v399 = vrot.slane %v369, 7
    %v400 = vrot.slane %v370, 6
    %v401 = vrot.slane %v371, 5
    %v402 = vrot.slane %v372, 4
    %v403 = vrot.slane %v373, 3
    %v404 = vrot.slane %v374, 2
    %v405 = vrot.slane %v375, 1
    %vm406 = vcmask 1040384
    %v407 = vsel %vm406, %v360, %v392
    %vm408 = vcmask 1042434
    %v409 = vsel %vm408, %v393, %v394
    %vm410 = vcmask 1041408
    %v411 = vsel %vm410, %v407, %v409
    %vm412 = vcmask 1044484
    %v413 = vsel %vm412, %v395, %v396
    %vm414 = vcmask 1046534
    %v415 = vsel %vm414, %v397, %v398
    %vm416 = vcmask 1045508
    %v417 = vsel %vm416, %v413, %v415
    %vm418 = vcmask 1043456
    %v419 = vsel %vm418, %v411, %v417
    %v420 = vsel %vm406, %v368, %v399
    %v421 = vsel %vm408, %v400, %v401
    %v422 = vsel %vm410, %v420, %v421
    %v423 = vsel %vm412, %v402, %v403
    %v424 = vsel %vm414, %v404, %v405
    %v425 = vsel %vm416, %v423, %v424
    %v426 = vsel %vm418, %v422, %v425
    %429 = vst [vmem:[#allocation5] sm:$0xff] %v419
    %430 = vst [vmem:[#allocation5 + $0x8] sm:$0xff] %v426
    // Predicated region
    $region10: #{tpu_custom_call.1} parent=1 // pred_check
      _
    $region11: #{tpu_custom_call.1} parent=1 // pred_check_branch
      %432 = sbr.rel (0) target = $region13
    $region12: #{tpu_custom_call.1} parent=1 // pred_region
      %434 = vsyncadd [#allocation4], 0
      %s436 = sshll.u32 [#allocation5], 4
      %s437 = int_to_ptr.vmem [resolvable:$true] %s436
      %s438 = sshll.u32 %s1, 4
      %s439 = int_to_ptr.hbm [resolvable:$true] %s438
      %441 = dma.vmem_to_hbm [thread:$0]  %s437, 256, %s439, [#allocation4]
    $region13: #{tpu_custom_call.1} parent=1 // pred_fallthru
      _
    // Predicated region
    $region14: #{tpu_custom_call.1} parent=1 // pred_check
      _
    $region15: #{tpu_custom_call.1} parent=1 // pred_check_branch
      %443 = sbr.rel (0) target = $region17
    $region16: #{tpu_custom_call.1} parent=1 // pred_region
      %445 = dma.done [#allocation4], 256
    $region17: #{tpu_custom_call.1} parent=1 // pred_fallthru
      _
    %446 = vsyncpa [#allocation3], 1
    %447 = vsyncpa [#allocation4], 1

</llo_original>
